<compile_context>
chip_gen: v5e
topology: v5e:2x2
jax: 0.10.0
libtpu: 0.0.40
codegen_flags: <defaults>
</compile_context>

<pallas_src>
import functools
import math

import jax
import jax.numpy as jnp
from jax.experimental import pallas as pl
from jax.experimental.pallas import tpu as pltpu


# ----------------------------- config ---------------------------------------
class Config:
    hidden_size = 64
    intermediate_size = 128
    num_attention_heads = 4
    num_key_value_heads = 2          # GQA: num_key_value_groups = 2
    num_hidden_layers = 2
    vocab_size = 256
    max_position_embeddings = 64
    rms_norm_eps = 1e-6
    rope_theta = 10000.0
    rope_scaling = None


# ----------------------------- helpers ---------------------------------------
def _round_up(n, m):
    return ((n + m - 1) // m) * m


def _pick_tile(n, cap):
    """Largest divisor of n that is <= cap, preferring lane-dense 128-multiples."""
    if n <= cap:
        return n
    best = None
    for t in range(cap, 0, -1):
        if n % t == 0:
            if t % 128 == 0:
                return t
            if best is None:
                best = t
    return best if best is not None else n


def _nbytes(shape, dtype):
    return math.prod(shape) * jnp.dtype(dtype).itemsize


def _compiler_params(semantics, block_bytes):
    # ~double-buffered footprint + headroom; floor above the 16/32 MiB default
    # scoped limits, cap well under v7x's 64 MiB physical VMEM.
    est = int(block_bytes * 2.2) + (4 << 20)
    limit = max(32 << 20, min(est, 56 << 20))
    return pltpu.CompilerParams(dimension_semantics=semantics,
                                vmem_limit_bytes=limit)


# ----------------------------- fused RMSNorm + matmul ------------------------
def _norm_matmul_kernel(x_ref, nw_ref, w_ref, o_ref, *, eps):
    x = x_ref[...].astype(jnp.float32)
    var = jnp.mean(x * x, axis=-1, keepdims=True)
    xn = (x * jax.lax.rsqrt(var + eps) * nw_ref[...].astype(jnp.float32))
    xn = xn.astype(w_ref.dtype)
    o_ref[...] = jnp.dot(xn, w_ref[...],
                         preferred_element_type=jnp.float32).astype(o_ref.dtype)


def fused_norm_matmul(x, norm_w, w, eps, out_dtype=None, tn_cap=1024, tm_cap=512):
    """x: (M, H), norm_w: (1, H), w: (H, N) -> (M, N).
    Grid = (N tiles, M tiles) with rows innermost: the (H, tn) weight tile stays
    resident in VMEM across row tiles, so every weight byte is read from HBM once."""
    M, H = x.shape
    N = w.shape[1]
    tm = _pick_tile(M, tm_cap)
    tn = _pick_tile(N, tn_cap)
    out_dtype = out_dtype if out_dtype is not None else x.dtype
    blk = (_nbytes((tm, H), x.dtype) + _nbytes((1, H), norm_w.dtype)
           + _nbytes((H, tn), w.dtype) + _nbytes((tm, tn), out_dtype))
    return pl.pallas_call(
        functools.partial(_norm_matmul_kernel, eps=eps),
        out_shape=jax.ShapeDtypeStruct((M, N), out_dtype),
        grid=(N // tn, M // tm),
        in_specs=[pl.BlockSpec((tm, H), lambda j, i: (i, 0)),
                  pl.BlockSpec((1, H), lambda j, i: (0, 0)),
                  pl.BlockSpec((H, tn), lambda j, i: (0, j))],
        out_specs=pl.BlockSpec((tm, tn), lambda j, i: (i, j)),
        compiler_params=_compiler_params(("parallel", "arbitrary"), blk),
    )(x, norm_w, w)


# ----------------------------- matmul + residual (o_proj) --------------------
def _matmul_residual_kernel(x_ref, w_ref, r_ref, o_ref):
    acc = jnp.dot(x_ref[...], w_ref[...], preferred_element_type=jnp.float32)
    o_ref[...] = (acc + r_ref[...].astype(jnp.float32)).astype(o_ref.dtype)


def matmul_residual(x, w, resid, tn_cap=1024, tm_cap=512):
    """x: (M, K), w: (K, N), resid: (M, N) -> (M, N).  N-tiled; rows innermost
    so the wo column tile is streamed once and held resident."""
    M, K = x.shape
    N = w.shape[1]
    tm = _pick_tile(M, tm_cap)
    tn = _pick_tile(N, tn_cap)
    blk = (_nbytes((tm, K), x.dtype) + _nbytes((K, tn), w.dtype)
           + 2 * _nbytes((tm, tn), resid.dtype))
    return pl.pallas_call(
        _matmul_residual_kernel,
        out_shape=jax.ShapeDtypeStruct((M, N), resid.dtype),
        grid=(N // tn, M // tm),
        in_specs=[pl.BlockSpec((tm, K), lambda j, i: (i, 0)),
                  pl.BlockSpec((K, tn), lambda j, i: (0, j)),
                  pl.BlockSpec((tm, tn), lambda j, i: (i, j))],
        out_specs=pl.BlockSpec((tm, tn), lambda j, i: (i, j)),
        compiler_params=_compiler_params(("parallel", "arbitrary"), blk),
    )(x, w, resid)


# ----------------------------- fused RMSNorm + SwiGLU MLP (+ residual) -------
def _norm_mlp_kernel(h_ref, nw_ref, wg_ref, wu_ref, wd_ref, o_ref,
                     xn_ref, acc_ref, *, eps):
    k = pl.program_id(1)

    @pl.when(k == 0)
    def _init():
        hf = h_ref[...].astype(jnp.float32)
        var = jnp.mean(hf * hf, axis=-1, keepdims=True)
        xn = hf * jax.lax.rsqrt(var + eps) * nw_ref[...].astype(jnp.float32)
        xn_ref[...] = xn.astype(xn_ref.dtype)      # normed act cached in VMEM
        acc_ref[...] = hf                          # residual seeds the f32 accumulator

    xn = xn_ref[...]
    g = jnp.dot(xn, wg_ref[...], preferred_element_type=jnp.float32)   # (tm, ti)
    u = jnp.dot(xn, wu_ref[...], preferred_element_type=jnp.float32)
    act = (g * jax.nn.sigmoid(g)) * u                                   # SiLU * up
    acc_ref[...] += jnp.dot(act.astype(wd_ref.dtype), wd_ref[...],
                            preferred_element_type=jnp.float32)

    @pl.when(k == pl.num_programs(1) - 1)
    def _fin():
        o_ref[...] = acc_ref[...].astype(o_ref.dtype)


def fused_norm_mlp(h, norm_w, wg, wu, wd, eps, ti_cap=512, tm_cap=256):
    """h: (M, H), wg/wu: (H, Ipad), wd: (Ipad, H) -> (M, H) (residual included).
    I-tiled reduction with f32 VMEM accumulator; padded I columns/rows are zero."""
    M, H = h.shape
    Ipad = wg.shape[1]
    tm = _pick_tile(M, tm_cap)
    ti = _pick_tile(Ipad, ti_cap)
    blk = (_nbytes((tm, H), h.dtype) + _nbytes((1, H), norm_w.dtype)
           + 2 * _nbytes((H, ti), wg.dtype) + _nbytes((ti, H), wd.dtype)
           + 2 * _nbytes((tm, H), h.dtype)           # out + xn scratch
           + _nbytes((tm, H), jnp.float32))          # acc scratch
    return pl.pallas_call(
        functools.partial(_norm_mlp_kernel, eps=eps),
        out_shape=jax.ShapeDtypeStruct((M, H), h.dtype),
        grid=(M // tm, Ipad // ti),
        in_specs=[pl.BlockSpec((tm, H), lambda i, k: (i, 0)),
                  pl.BlockSpec((1, H), lambda i, k: (0, 0)),
                  pl.BlockSpec((H, ti), lambda i, k: (0, k)),
                  pl.BlockSpec((H, ti), lambda i, k: (0, k)),
                  pl.BlockSpec((ti, H), lambda i, k: (k, 0))],
        out_specs=pl.BlockSpec((tm, H), lambda i, k: (i, 0)),
        scratch_shapes=[pltpu.VMEM((tm, H), h.dtype),
                        pltpu.VMEM((tm, H), jnp.float32)],
        compiler_params=_compiler_params(("parallel", "arbitrary"), blk),
    )(h, norm_w, wg, wu, wd)


# ----------------------------- flash attention (RoPE fused) ------------------
def _flash_attn_kernel(q_ref, kv_ref, cq_ref, sq_ref, ck_ref, sk_ref, o_ref,
                       qrot_ref, m_ref, l_ref, acc_ref,
                       *, nh, nkv, hd, tq, tk, scale):
    qi = pl.program_id(1)
    ki = pl.program_id(2)
    hd2 = hd // 2
    n_rep = nh // nkv

    @pl.when(ki == 0)
    def _init():
        m_ref[...] = jnp.full_like(m_ref, -1e30)
        l_ref[...] = jnp.zeros_like(l_ref)
        acc_ref[...] = jnp.zeros_like(acc_ref)
        cq = cq_ref[...]                                   # (tq, hd/2) f32
        sq = sq_ref[...]
        q = q_ref[0].astype(jnp.float32)                   # (tq, nh*hd)
        # RoPE on q (real = first half, imag = second half) + 1/sqrt(hd), in f32.
        for h in range(nh):
            qr = q[:, h * hd: h * hd + hd2]
            qim = q[:, h * hd + hd2: (h + 1) * hd]
            qrot_ref[:, h * hd: h * hd + hd2] = (
                (qr * cq - qim * sq) * scale).astype(qrot_ref.dtype)
            qrot_ref[:, h * hd + hd2: (h + 1) * hd] = (
                (qr * sq + qim * cq) * scale).astype(qrot_ref.dtype)

    # Skip kv tiles that are entirely above the causal diagonal.
    @pl.when(ki * tk <= qi * tq + (tq - 1))
    def _compute():
        ck = ck_ref[...]
        sk = sk_ref[...]
        kv = kv_ref[0]                                     # (tk, 2*nkv*hd) bf16
        row = qi * tq + jax.lax.broadcasted_iota(jnp.int32, (tq, tk), 0)
        col = ki * tk + jax.lax.broadcasted_iota(jnp.int32, (tq, tk), 1)
        causal = col <= row
        for g in range(nkv):                               # K/V group loaded/rotated once
            kg = kv[:, g * hd:(g + 1) * hd].astype(jnp.float32)
            kr = kg[:, :hd2]
            kim = kg[:, hd2:]
            kg_rot = jnp.concatenate([kr * ck - kim * sk, kr * sk + kim * ck],
                                     axis=-1).astype(kv.dtype)
            vg = kv[:, nkv * hd + g * hd: nkv * hd + (g + 1) * hd]
            for r in range(n_rep):                         # query heads sharing this group
                h = g * n_rep + r
                qh = qrot_ref[:, h * hd:(h + 1) * hd]
                s = jax.lax.dot_general(qh, kg_rot, (((1,), (1,)), ((), ())),
                                        preferred_element_type=jnp.float32)
                s = jnp.where(causal, s, -1e30)
                m_prev = m_ref[:, h:h + 1]
                m_new = jnp.maximum(m_prev, jnp.max(s, axis=-1, keepdims=True))
                alpha = jnp.exp(m_prev - m_new)
                p = jnp.where(causal, jnp.exp(s - m_new), 0.0)
                l_ref[:, h:h + 1] = (alpha * l_ref[:, h:h + 1]
                                     + jnp.sum(p, axis=-1, keepdims=True))
                acc_ref[:, h * hd:(h + 1) * hd] = (
                    alpha * acc_ref[:, h * hd:(h + 1) * hd]
                    + jnp.dot(p.astype(vg.dtype), vg,
                              preferred_element_type=jnp.float32))
                m_ref[:, h:h + 1] = m_new

    @pl.when(ki == pl.num_programs(2) - 1)
    def _fin():
        for h in range(nh):                                # exact f32 divide, direct store
            o_ref[0, :, h * hd:(h + 1) * hd] = (
                acc_ref[:, h * hd:(h + 1) * hd] / l_ref[:, h:h + 1]
            ).astype(o_ref.dtype)


def flash_attention(q, kv, cos, sin, nh, nkv, hd, tile_cap=256):
    """q: (B, S, nh*hd) un-rotated; kv: (B, S, 2*nkv*hd) packed [k|v] un-rotated;
    cos/sin: (S, hd/2) f32.  Returns (B, S, nh*hd)."""
    B, S, Dq = q.shape
    Dkv = kv.shape[-1]
    hd2 = hd // 2
    t = _pick_tile(S, tile_cap)
    tq = tk = t                        # equal tiles keep the causal online-softmax simple
    scale = 1.0 / math.sqrt(hd)
    blk = (2 * _nbytes((1, tq, Dq), q.dtype) + _nbytes((1, tk, Dkv), kv.dtype)
           + 4 * _nbytes((tq, hd2), cos.dtype)
           + _nbytes((tq, Dq), q.dtype)
           + 2 * _nbytes((tq, nh), jnp.float32)
           + _nbytes((tq, Dq), jnp.float32))
    kernel = functools.partial(_flash_attn_kernel, nh=nh, nkv=nkv, hd=hd,
                               tq=tq, tk=tk, scale=scale)
    return pl.pallas_call(
        kernel,
        out_shape=jax.ShapeDtypeStruct((B, S, Dq), q.dtype),
        grid=(B, S // tq, S // tk),
        in_specs=[pl.BlockSpec((1, tq, Dq), lambda b, qi, ki: (b, qi, 0)),
                  pl.BlockSpec((1, tk, Dkv), lambda b, qi, ki: (b, ki, 0)),
                  pl.BlockSpec((tq, hd2), lambda b, qi, ki: (qi, 0)),
                  pl.BlockSpec((tq, hd2), lambda b, qi, ki: (qi, 0)),
                  pl.BlockSpec((tk, hd2), lambda b, qi, ki: (ki, 0)),
                  pl.BlockSpec((tk, hd2), lambda b, qi, ki: (ki, 0))],
        out_specs=pl.BlockSpec((1, tq, Dq), lambda b, qi, ki: (b, qi, 0)),
        scratch_shapes=[pltpu.VMEM((tq, Dq), q.dtype),        # rotated+scaled q
                        pltpu.VMEM((tq, nh), jnp.float32),    # m
                        pltpu.VMEM((tq, nh), jnp.float32),    # l
                        pltpu.VMEM((tq, Dq), jnp.float32)],   # acc
        compiler_params=_compiler_params(("parallel", "parallel", "arbitrary"),
                                         blk),
    )(q, kv, cos, sin, cos, sin)


# ----------------------------- RoPE tables (trace-time) ----------------------
def precompute_cos_sin(dim, end, theta=10000.0, scale=1.0):
    freqs = 1.0 / (theta ** (jnp.arange(0, dim, 2)[: dim // 2].astype(jnp.float32) / dim))
    t = jnp.arange(end, dtype=jnp.float32) * scale
    freqs = jnp.outer(t, freqs)
    return jnp.cos(freqs), jnp.sin(freqs)


# ----------------------------- params ----------------------------------------
def init_params(cfg, key):
    H, I, V = cfg.hidden_size, cfg.intermediate_size, cfg.vocab_size
    nh, nkv = cfg.num_attention_heads, cfg.num_key_value_heads
    hd = H // nh
    I_pad = _round_up(I, 128)
    V_pad = _round_up(V, 128)

    def dense(k, shape, scale=0.02):
        return (scale * jax.random.normal(k, shape, dtype=jnp.float32)
                ).astype(jnp.bfloat16)

    def pad_cols(w, n):
        return w if w.shape[1] == n else jnp.pad(w, ((0, 0), (0, n - w.shape[1])))

    def pad_rows(w, n):
        return w if w.shape[0] == n else jnp.pad(w, ((0, n - w.shape[0]), (0, 0)))

    keys = jax.random.split(key, 2 + 7 * cfg.num_hidden_layers)
    params = {
        "embed": dense(keys[0], (V, H)),
        "lm_head": pad_cols(dense(keys[1], (H, V)), V_pad),  # zero-padded vocab
        "final_norm": jnp.ones((1, H), jnp.float32),
        "layers": [],
    }
    idx = 2
    for _ in range(cfg.num_hidden_layers):
        k = keys[idx: idx + 7]
        idx += 7
        wq = dense(k[0], (H, nh * hd))
        wk = dense(k[1], (H, nkv * hd))
        wv = dense(k[2], (H, nkv * hd))
        params["layers"].append({
            "wqkv": jnp.concatenate([wq, wk, wv], axis=1),    # packed q|k|v
            "wo": dense(k[3], (nh * hd, H)),
            "wg": pad_cols(dense(k[4], (H, I)), I_pad),       # zero-padded I
            "wu": pad_cols(dense(k[5], (H, I)), I_pad),
            "wd": pad_rows(dense(k[6], (I, H)), I_pad),
            "input_norm": jnp.ones((1, H), jnp.float32),
            "post_norm": jnp.ones((1, H), jnp.float32),
        })
    return params


# ----------------------------- forward ----------------------------------------
def llama_forward(params, cfg, tokens, start_pos=0):
    bsz, seqlen = tokens.shape
    H = cfg.hidden_size
    nh, nkv = cfg.num_attention_heads, cfg.num_key_value_heads
    hd = H // nh
    Dq, Dk = nh * hd, nkv * hd
    M = bsz * seqlen

    # Token embedding (XLA gather).
    h = params["embed"][tokens]                               # (b, s, H) bf16

    rope_scale = (1.0 if cfg.rope_scaling is None
                  else 1.0 / cfg.rope_scaling["factor"])
    cos, sin = precompute_cos_sin(hd, cfg.max_position_embeddings * 2,
                                  cfg.rope_theta, rope_scale)
    cos = cos[start_pos: start_pos + seqlen]                  # (s, hd/2) f32
    sin = sin[start_pos: start_pos + seqlen]

    for lp in params["layers"]:
        # ---- attention block: fused norm+QKV, flash attention (RoPE inside) ----
        x2 = h.reshape(M, H)                                  # residual (bf16)
        qkv = fused_norm_matmul(x2, lp["input_norm"], lp["wqkv"],
                                cfg.rms_norm_eps)             # (M, Dq+2Dk)
        q = qkv[:, :Dq].reshape(bsz, seqlen, Dq)
        kvp = qkv[:, Dq:].reshape(bsz, seqlen, 2 * Dk)        # packed [k|v]
        attn = flash_attention(q, kvp, cos, sin, nh, nkv, hd) # (b, s, Dq)
        h2 = matmul_residual(attn.reshape(M, Dq), lp["wo"], x2)

        # ---- MLP block: norm + SwiGLU + residual, I-tiled reduction ----
        h = fused_norm_mlp(h2, lp["post_norm"], lp["wg"], lp["wu"], lp["wd"],
                           cfg.rms_norm_eps).reshape(bsz, seqlen, H)

    # Last token -> fused final RMSNorm + lm_head (vocab-tiled), f32 logits.
    h_last = h[:, -1, :]                                      # (b, H)
    logits = fused_norm_matmul(h_last, params["final_norm"], params["lm_head"],
                               cfg.rms_norm_eps, out_dtype=jnp.float32)
    logits = logits[:, : cfg.vocab_size]                      # drop vocab padding
    return logits[:, None, :]                                 # (b, 1, V) f32


# ----------------------------- main -------------------------------------------
if __name__ == "__main__":
    cfg = Config()
    key = jax.random.PRNGKey(0)
    pkey, tkey = jax.random.split(key)
    params = init_params(cfg, pkey)

    bsz, seqlen = 2, 8
    tokens = jax.random.randint(tkey, (bsz, seqlen), 0, cfg.vocab_size,
                                dtype=jnp.int32)

    out = llama_forward(params, cfg, tokens, start_pos=0)
    jax.block_until_ready(out)

    assert out.shape == (bsz, 1, cfg.vocab_size), out.shape
    assert out.dtype == jnp.float32
    assert bool(jnp.isfinite(out).all())
    print("KERNEL_OK")
</pallas_src>

<mosaic_0001>
module attributes {stable_mosaic.version = 11 : i64} {
  func.func @_norm_matmul_kernel(%arg0: i32, %arg1: i32, %arg2: memref<16x64xbf16, #tpu.memory_space<vmem>>, %arg3: memref<1x64xf32, #tpu.memory_space<vmem>>, %arg4: memref<64x128xbf16, #tpu.memory_space<vmem>>, %arg5: memref<16x128xbf16, #tpu.memory_space<vmem>>) attributes {dimension_semantics = [#tpu.dimension_semantics<parallel>, #tpu.dimension_semantics<arbitrary>], iteration_bounds = array<i64: 1, 1>, scalar_prefetch = 0 : i64, scratch_operands = 0 : i64, tpu.core_type = #tpu.core_type<tc>, window_params = [{transform_indices = @transform_0, window_bounds = array<i64: 16, 64>}, {pipeline_mode = #tpu.pipeline_mode<synchronous>, transform_indices = @transform_1, window_bounds = array<i64: 1, 64>}, {transform_indices = @transform_2, window_bounds = array<i64: 64, 128>}, {transform_indices = @transform_3, window_bounds = array<i64: 16, 128>}]} {
    %c0 = arith.constant 0 : index
    %c0_0 = arith.constant 0 : index
    %0 = vector.load %arg2[%c0, %c0_0] : memref<16x64xbf16, #tpu.memory_space<vmem>>, vector<16x64xbf16>
    %1 = arith.extf %0 : vector<16x64xbf16> to vector<16x64xf32>
    %2 = arith.mulf %1, %1 : vector<16x64xf32>
    %cst = arith.constant dense<0.000000e+00> : vector<16xf32>
    %3 = vector.multi_reduction <add>, %2, %cst [1] : vector<16x64xf32> to vector<16xf32>
    %4 = vector.shape_cast %3 : vector<16xf32> to vector<16x1xf32>
    %cst_1 = arith.constant 6.400000e+01 : f32
    %5 = vector.broadcast %cst_1 : f32 to vector<16x1xf32>
    %6 = arith.divf %4, %5 : vector<16x1xf32>
    %cst_2 = arith.constant 9.99999997E-7 : f32
    %7 = vector.broadcast %cst_2 : f32 to vector<16x1xf32>
    %8 = arith.addf %6, %7 : vector<16x1xf32>
    %9 = math.rsqrt %8 : vector<16x1xf32>
    %10 = vector.broadcast %9 : vector<16x1xf32> to vector<16x64xf32>
    %11 = arith.mulf %1, %10 : vector<16x64xf32>
    %c0_3 = arith.constant 0 : index
    %c0_4 = arith.constant 0 : index
    %12 = vector.load %arg3[%c0_3, %c0_4] : memref<1x64xf32, #tpu.memory_space<vmem>>, vector<1x64xf32>
    %13 = vector.broadcast %12 : vector<1x64xf32> to vector<16x64xf32>
    %14 = arith.mulf %11, %13 : vector<16x64xf32>
    %15 = arith.truncf %14 : vector<16x64xf32> to vector<16x64xbf16>
    %c0_5 = arith.constant 0 : index
    %c0_6 = arith.constant 0 : index
    %16 = vector.load %arg4[%c0_5, %c0_6] : memref<64x128xbf16, #tpu.memory_space<vmem>>, vector<64x128xbf16>
    %cst_7 = arith.constant dense<0.000000e+00> : vector<16x128xf32>
    %17 = tpu.matmul %15, %16, %cst_7 {dimension_numbers = #tpu.dot_dimension_numbers<[1], [0], [0], [1], [0, 0, 1, 1], [], []>} : vector<16x64xbf16>, vector<64x128xbf16>, vector<16x128xf32> -> vector<16x128xf32>
    %18 = arith.truncf %17 : vector<16x128xf32> to vector<16x128xbf16>
    %c0_8 = arith.constant 0 : index
    %c0_9 = arith.constant 0 : index
    %19 = vector.load %arg5[%c0_8, %c0_9] : memref<16x128xbf16, #tpu.memory_space<vmem>>, vector<16x128xbf16>
    tpu.vector_store %arg5[%c0_8, %c0_9], %18 {strides = array<i32>} : memref<16x128xbf16, #tpu.memory_space<vmem>>, vector<16x128xbf16>,
    return
  }
  func.func @transform_0(%arg0: i32, %arg1: i32) -> (i32, i32) {
    %c0_i32 = arith.constant 0 : i32
    %c0_i32_0 = arith.constant 0 : i32
    return %arg1, %c0_i32 : i32, i32
  }
  func.func @transform_1(%arg0: i32, %arg1: i32) -> (i32, i32) {
    %c0_i32 = arith.constant 0 : i32
    %c0_i32_0 = arith.constant 0 : i32
    %c0_i32_1 = arith.constant 0 : i32
    return %c0_i32, %c0_i32_0 : i32, i32
  }
  func.func @transform_2(%arg0: i32, %arg1: i32) -> (i32, i32) {
    %c0_i32 = arith.constant 0 : i32
    %c0_i32_0 = arith.constant 0 : i32
    return %c0_i32, %arg0 : i32, i32
  }
  func.func @transform_3(%arg0: i32, %arg1: i32) -> (i32, i32) {
    %c0_i32 = arith.constant 0 : i32
    return %arg1, %arg0 : i32, i32
  }
}

</mosaic_0001>

<llo_original>
// kernel: tpu_custom_call.1
$region0: #{tpu_custom_call.1}
  #allocation0 [shape = 'u32[]', space=smem, size = 0x4, offset = 0x4, fixed_abs, tag = 'smem constant byte address 0x4 - core index']
  #allocation1 [shape = 'u32[72,128]{1,0:T(1,128)}', space=vmem, size = 0x9000, scoped, tag = 'internal scratch']
  %s0 = inlined_call_operand.hbm [shape: bf16[16,64], index: 0, kind: input, shape index: {}]
  %s1 = inlined_call_operand.hbm [shape: f32[1,64], index: 1, kind: input, shape index: {}]
  %s2 = inlined_call_operand.hbm [shape: bf16[64,128], index: 2, kind: input, shape index: {}]
  %s3 = inlined_call_operand.hbm [shape: bf16[16,128], index: 3, kind: output, shape index: {}]
  %s4 = sld [smem:[#allocation0]]
  $region34: #{tpu_custom_call.1} parent=0
    _
  %s6 = ssub.s32 1, %s4
  %s7 = scalar_select 0, %s6, %s4
  $region1: #{tpu_custom_call.1} parent=0
    #allocation2 [shape = 'u8[4096]{0}', space=vmem, size = 0x1000, scoped, tag = 'input window, operand 0, single buffered']
    #allocation3 [shape = 's32[1]{0}', space=sflag, size = 0x4, scoped, tag = 'scoped memory for tpu_custom_call.1']
    #allocation4 [shape = 's32[1]{0}', space=sflag, size = 0x4, scoped, tag = 'scoped memory for tpu_custom_call.1']
    #allocation5 [shape = 'u8[512]{0}', space=vmem, size = 0x400, scoped, tag = 'input window, operand 1, single buffered']
    #allocation6 [shape = 's32[1]{0}', space=sflag, size = 0x4, scoped, tag = 'scoped memory for tpu_custom_call.1']
    #allocation7 [shape = 'u8[16384]{0}', space=vmem, size = 0x4000, scoped, tag = 'input window, operand 2, single buffered']
    #allocation8 [shape = 'u8[4096]{0}', space=vmem, size = 0x1000, scoped, tag = 'output window, operand 0, single buffered']
    %8 = vsyncpa [#allocation3], 0
    %9 = vsyncpa [#allocation6], 0
    %10 = vsyncpa [#allocation4], 0
    // Predicated region
    $region2: #{tpu_custom_call.1} parent=1 // pred_check
      _
    $region3: #{tpu_custom_call.1} parent=1 // pred_check_branch
      %12 = sbr.rel (0) target = $region5
    $region4: #{tpu_custom_call.1} parent=1 // pred_region
      %14 = vsyncadd [#allocation3], 0
      %s15 = sshll.u32 %s0, 4
      %s16 = int_to_ptr.hbm [resolvable:$true] %s15
      %s17 = sshll.u32 [#allocation2], 4
      %s18 = int_to_ptr.vmem [resolvable:$true] %s17
      %23 = dma.hbm_to_vmem [thread:$0]  %s16, 128, %s18, [#allocation3], 64, 64, 4
    $region5: #{tpu_custom_call.1} parent=1 // pred_fallthru
      _
    // Predicated region
    $region6: #{tpu_custom_call.1} parent=1 // pred_check
      _
    $region7: #{tpu_custom_call.1} parent=1 // pred_check_branch
      %25 = sbr.rel (0) target = $region9
    $region8: #{tpu_custom_call.1} parent=1 // pred_region
      %27 = vsyncadd [#allocation6], 0
      %s29 = sshll.u32 %s1, 4
      %s30 = int_to_ptr.hbm [resolvable:$true] %s29
      %s31 = sshll.u32 [#allocation5], 4
      %s32 = int_to_ptr.vmem [resolvable:$true] %s31
      %34 = dma.hbm_to_vmem [thread:$0]  %s30, 16, %s32, [#allocation6]
    $region9: #{tpu_custom_call.1} parent=1 // pred_fallthru
      _
    // Predicated region
    $region10: #{tpu_custom_call.1} parent=1 // pred_check
      _
    $region11: #{tpu_custom_call.1} parent=1 // pred_check_branch
      %36 = sbr.rel (0) target = $region13
    $region12: #{tpu_custom_call.1} parent=1 // pred_region
      %38 = vsyncadd [#allocation6], 0
      %s39 = sshll.u32 %s2, 4
      %s40 = int_to_ptr.hbm [resolvable:$true] %s39
      %s41 = sshll.u32 [#allocation7], 4
      %s42 = int_to_ptr.vmem [resolvable:$true] %s41
      %47 = dma.hbm_to_vmem [thread:$0]  %s40, 512, %s42, [#allocation6], 64, 64, 4
    $region13: #{tpu_custom_call.1} parent=1 // pred_fallthru
      _
    // Predicated region
    $region14: #{tpu_custom_call.1} parent=1 // pred_check
      _
    $region15: #{tpu_custom_call.1} parent=1 // pred_check_branch
      %49 = sbr.rel (0) target = $region17
    $region16: #{tpu_custom_call.1} parent=1 // pred_region
      %51 = dma.done [#allocation3], 128
    $region17: #{tpu_custom_call.1} parent=1 // pred_fallthru
      _
    // Predicated region
    $region18: #{tpu_custom_call.1} parent=1 // pred_check
      _
    $region19: #{tpu_custom_call.1} parent=1 // pred_check_branch
      %53 = sbr.rel (0) target = $region21
    $region20: #{tpu_custom_call.1} parent=1 // pred_region
      %55 = dma.done [#allocation6], 16
    $region21: #{tpu_custom_call.1} parent=1 // pred_fallthru
      _
    // Predicated region
    $region22: #{tpu_custom_call.1} parent=1 // pred_check
      _
    $region23: #{tpu_custom_call.1} parent=1 // pred_check_branch
      %57 = sbr.rel (0) target = $region25
    $region24: #{tpu_custom_call.1} parent=1 // pred_region
      %59 = dma.done [#allocation6], 512
    $region25: #{tpu_custom_call.1} parent=1 // pred_fallthru
      _
    %v61 = vld [vmem:[#allocation2] sm:$0xf]
    %v62 = vld [vmem:[#allocation2 + $0x4] sm:$0xf]
    %v63 = vunpack.c.l.bf16 %v61
    %v64 = vunpack.c.l.bf16 %v62
    %v65 = vmul.f32 %v63, %v63
    %v66 = vmul.f32 %v64, %v64
    %vm67 = vcmask 523264
    %v68 = vsel %vm67, %v65, 0.0
    %69 = vadd.xlane.f32.xlu0 %v68
    %v70 = vpop.xlane.xlu0 %69
    %v71 = vsel %vm67, %v66, 0.0
    %72 = vadd.xlane.f32.xlu0 %v71
    %v73 = vpop.xlane.xlu0 %72
    %v74 = vrcp.pop 64.0
    %v75 = vmul.f32 64.0, %v74
    %v76 = vsub.f32 1.0, %v75
    %v77 = vmul.f32 %v74, %v76
    %v78 = vadd.f32 %v74, %v77
    %vm79 = vweird.f32 %v74
    %v80 = vsel %vm79, %v74, %v78
    %v81 = vmul.f32 %v70, %v80
    %v82 = vmul.f32 %v73, %v80
    %v83 = vadd.f32 %v81, 1e-06
    %v84 = vadd.f32 %v82, 1e-06
    %v85 = vrsqrt.pop %v83
    %v86 = vmul.f32 %v85, %v83
    %v87 = vmul.f32 %v86, %v85
    %v88 = vmul.f32 0.5, %v87
    %v89 = vsub.f32 1.5, %v88
    %v90 = vmul.f32 %v85, %v89
    %vm91 = vweird.f32 %v83
    %vm92 = vweird.f32 %v85
    %vm93 = vmor %vm91, %vm92
    %v94 = vsel %vm93, %v85, %v90
    %v95 = vrsqrt.pop %v84
    %v96 = vmul.f32 %v95, %v84
    %v97 = vmul.f32 %v96, %v95
    %v98 = vmul.f32 0.5, %v97
    %v99 = vsub.f32 1.5, %v98
    %v100 = vmul.f32 %v95, %v99
    %vm101 = vweird.f32 %v84
    %vm102 = vweird.f32 %v95
    %vm103 = vmor %vm101, %vm102
    %v104 = vsel %vm103, %v95, %v100
    %v105 = vmul.f32 %v63, %v94
    %v106 = vmul.f32 %v64, %v104
    %v107 = vld [vmem:[#allocation5] sm:$0x1]
    %v109 = vperm.slane %v107, 0
    %v111 = vmul.f32 %v105, %v109
    %v112 = vmul.f32 %v106, %v109
    %v113 = vpack.c.bf16 %v112, %v111
    %v114 = vld [vmem:[#allocation7] sm:$0xf]
    %v115 = vld [vmem:[#allocation7 + $0x4] sm:$0xf]
    %v116 = vld [vmem:[#allocation7 + $0x8] sm:$0xf]
    %v117 = vld [vmem:[#allocation7 + $0xc] sm:$0xf]
    %v118 = vld [vmem:[#allocation7 + $0x10] sm:$0xf]
    %v119 = vld [vmem:[#allocation7 + $0x14] sm:$0xf]
    %v120 = vld [vmem:[#allocation7 + $0x18] sm:$0xf]
    %v121 = vld [vmem:[#allocation7 + $0x1c] sm:$0xf]
    %v130 = vunpack.c.l.b16 %v114
    %v131 = vunpack.c.l.b16 %v115
    %v132 = vunpack.c.l.b16 %v116
    %v133 = vunpack.c.l.b16 %v117
    %v134 = vunpack.c.l.b16 %v118
    %v135 = vunpack.c.l.b16 %v119
    %v136 = vunpack.c.l.b16 %v120
    %v137 = vunpack.c.l.b16 %v121
    %v138 = vpack.c.b16 %v131, %v130
    %v139 = vpack.c.b16 %v133, %v132
    %v140 = vpack.c.b16 %v135, %v134
    %v141 = vpack.c.b16 %v137, %v136
    %v147 = vsel %vm67, %v113, 0
    %149 = vmatpush.bf16.msra.mxu0 0
    %150 = vmatpush.bf16.msra.mxu0 0
    %151 = vmatpush.bf16.msra.mxu0 0
    %152 = vmatpush.bf16.msra.mxu0 0
    %153 = vmatpush.bf16.msra.mxu0 %v141
    %154 = vmatpush.bf16.msra.mxu0 %v140
    %155 = vmatpush.bf16.msra.mxu0 %v139
    %156 = vmatpush.bf16.msra.mxu0 %v138
    %157 = vmatmul.bf16.gmra.mxu0 %v147
    %v158 = vpop.f32.mrf.mxu0
    %v159 = vadd.f32 0.0, %v158
    %v160 = vpop.f32.mrf.mxu0
    %v161 = vadd.f32 0.0, %v160
    %162 = vdwg.mxu0
    %v163 = vpack.c.bf16 %v159, %v159
    %v164 = vpack.c.bf16 %v161, %v161
    %165 = vst [vmem:[#allocation8] sm:$0xf] %v163
    %166 = vst [vmem:[#allocation8 + $0x4] sm:$0xf] %v164
    // Predicated region
    $region26: #{tpu_custom_call.1} parent=1 // pred_check
      _
    $region27: #{tpu_custom_call.1} parent=1 // pred_check_branch
      %168 = sbr.rel (0) target = $region29
    $region28: #{tpu_custom_call.1} parent=1 // pred_region
      %170 = vsyncadd [#allocation4], 0
      %s171 = sshll.u32 [#allocation8], 4
      %s172 = int_to_ptr.vmem [resolvable:$true] %s171
      %s173 = sshll.u32 %s3, 4
      %s174 = int_to_ptr.hbm [resolvable:$true] %s173
      %179 = dma.vmem_to_hbm [thread:$0]  %s172, 128, %s174, [#allocation4], 64, 64, 4
    $region29: #{tpu_custom_call.1} parent=1 // pred_fallthru
      _
    // Predicated region
    $region30: #{tpu_custom_call.1} parent=1 // pred_check
      _
    $region31: #{tpu_custom_call.1} parent=1 // pred_check_branch
      %181 = sbr.rel (0) target = $region33
    $region32: #{tpu_custom_call.1} parent=1 // pred_region
      %183 = dma.done [#allocation4], 128
    $region33: #{tpu_custom_call.1} parent=1 // pred_fallthru
      _
    %184 = vsyncpa [#allocation3], 1
    %185 = vsyncpa [#allocation6], 1
    %186 = vsyncpa [#allocation4], 1

</llo_original>
